<compile_context>
chip_gen: v7x
topology: tpu7x:2x2x1
jax: 0.10.0
libtpu: 0.0.40
codegen_flags: <defaults>
</compile_context>

<pallas_src>
import functools

import jax
import jax.numpy as jnp
from jax import lax
from jax.experimental import pallas as pl
from jax.experimental.pallas import tpu as pltpu


# ------------------------- kernel 1: PromptLearner -------------------------- #
def _prompt_kernel(imf_ref, low_ref, mw1_ref, mb1_ref, mw2_ref, mb2_ref,
                   lw_ref, lb_ref, ctx_ref, pre_ref, suf_ref,
                   prompts_ref, topf_ref, imfn_ref, *, n_ctx, n_cls, batch):
    cdim = ctx_ref.shape[-1]
    n_suf = suf_ref.shape[0]

    # ---- normalize top image feature (rsqrt -> EUP slot) ----
    imf = imf_ref[...]                                             # [B, V]
    imf_n = imf * lax.rsqrt(jnp.sum(imf * imf, axis=-1, keepdims=True))
    imfn_ref[...] = imf_n

    # ---- meta_net MLP: Linear -> ReLU -> Linear (f32 on MXU) ----
    h = jnp.maximum(
        jnp.dot(imf_n, mw1_ref[...], preferred_element_type=jnp.float32)
        + mb1_ref[...], 0.0)                                       # [B, 2V]
    topf = (jnp.dot(h, mw2_ref[...], preferred_element_type=jnp.float32)
            + mb2_ref[...])                                        # [B, C]
    topf_ref[...] = topf

    # ---- linear1 on the averaged low-layer features (sum(...)/11) ----
    low_avg = jnp.sum(low_ref[...], axis=0) * (1.0 / 11.0)         # [B, T]
    bias_extra = (jnp.dot(low_avg, lw_ref[...],
                          preferred_element_type=jnp.float32)
                  + lb_ref[...])                                   # [B, C]

    # ---- prompt assembly (token-major output: [L, B, n_cls, C]) ----
    # prefix token (position 0), replicated over the batch axis
    prompts_ref[0] = jnp.broadcast_to(pre_ref[...][None, :, :],
                                      (batch, n_cls, cdim))

    # shifted context tokens (positions 1 .. n_ctx)
    ctx_all = ctx_ref[...]                                         # [n_ctx, C]
    half = n_ctx // 2
    for t in range(n_ctx):                                         # unrolled
        bias_t = bias_extra if t < half else topf                  # [B, C]
        row = ctx_all[t:t + 1, :] + bias_t                         # [B, C]
        prompts_ref[1 + t] = jnp.broadcast_to(row[:, None, :],
                                              (batch, n_cls, cdim))

    # suffix tokens (positions 1+n_ctx .. L-1), replicated over batch
    suf = suf_ref[...]                                             # [Ls, n_cls, C]
    prompts_ref[pl.ds(1 + n_ctx, n_suf)] = jnp.broadcast_to(
        suf[:, None, :, :], (n_suf, batch, n_cls, cdim))


def prompt_learner_forward(imf_top, low_feats, params):
    B, V = imf_top.shape
    n_low, _, T = low_feats.shape
    n_ctx, C = params["ctx"].shape
    n_cls = params["token_prefix"].shape[0]
    Ls = params["token_suffix"].shape[1]
    L = 1 + n_ctx + Ls

    # Wrapper-side layout plumbing (once per call): prefix as [n_cls, C],
    # suffix token-major [Ls, n_cls, C] so in-kernel stores are whole tiles.
    prefix2d = params["token_prefix"].reshape(n_cls, C)
    suffix_t = jnp.transpose(params["token_suffix"], (1, 0, 2))

    kernel = functools.partial(_prompt_kernel, n_ctx=n_ctx, n_cls=n_cls,
                               batch=B)
    full2 = lambda i: (0, 0)
    full3 = lambda i: (0, 0, 0)
    full4 = lambda i: (0, 0, 0, 0)

    prompts_lf, top_feature, imf_n = pl.pallas_call(
        kernel,
        grid=(1,),
        in_specs=[
            pl.BlockSpec((B, V), full2),              # top image feature
            pl.BlockSpec((n_low, B, T), full3),       # low-layer features
            pl.BlockSpec((V, 2 * V), full2),          # meta_net W1
            pl.BlockSpec((1, 2 * V), full2),          # meta_net b1
            pl.BlockSpec((2 * V, C), full2),          # meta_net W2
            pl.BlockSpec((1, C), full2),              # meta_net b2
            pl.BlockSpec((T, C), full2),              # linear1 W
            pl.BlockSpec((1, C), full2),              # linear1 b
            pl.BlockSpec((n_ctx, C), full2),          # ctx vectors
            pl.BlockSpec((n_cls, C), full2),          # token_prefix
            pl.BlockSpec((Ls, n_cls, C), full3),      # token_suffix (tok-major)
        ],
        out_specs=[
            pl.BlockSpec((L, B, n_cls, C), full4),    # prompts (token-major)
            pl.BlockSpec((B, C), full2),              # top_feature
            pl.BlockSpec((B, V), full2),              # normalized image feat
        ],
        out_shape=[
            jax.ShapeDtypeStruct((L, B, n_cls, C), jnp.float32),
            jax.ShapeDtypeStruct((B, C), jnp.float32),
            jax.ShapeDtypeStruct((B, V), jnp.float32),
        ],
        compiler_params=pltpu.CompilerParams(
            dimension_semantics=("arbitrary",)),
    )(imf_top, low_feats, params["m_w1"], params["m_b1"], params["m_w2"],
      params["m_b2"], params["l1_w"], params["l1_b"], params["ctx"],
      prefix2d, suffix_t)

    prompts = jnp.transpose(prompts_lf, (1, 2, 0, 3))   # [B, n_cls, L, C]
    return prompts, top_feature, imf_n


# --------------------------- kernel 2: logit head --------------------------- #
def _logits_kernel(scale_ref, imfn_ref, txt_ref, logits_ref):
    scale = scale_ref[0, 0]                                        # SMEM scalar
    imf = imfn_ref[...]                                            # [B, V]
    txt = txt_ref[...]                                             # [B, n_cls, V]
    inv = lax.rsqrt(jnp.sum(txt * txt, axis=-1, keepdims=True))    # EUP
    sim = jnp.sum((txt * inv) * imf[:, None, :], axis=-1)          # [B, n_cls]
    logits_ref[...] = scale * sim


def clip_logits(imf_n, text_features, logit_scale):
    B, V = imf_n.shape
    n_cls = text_features.shape[1]
    scale = jnp.exp(logit_scale).reshape(1, 1).astype(jnp.float32)
    full2 = lambda i: (0, 0)
    full3 = lambda i: (0, 0, 0)

    return pl.pallas_call(
        _logits_kernel,
        grid=(1,),
        in_specs=[
            pl.BlockSpec(memory_space=pltpu.MemorySpace.SMEM),     # exp(scale)
            pl.BlockSpec((B, V), full2),
            pl.BlockSpec((B, n_cls, V), full3),
        ],
        out_specs=pl.BlockSpec((B, n_cls), full2),
        out_shape=jax.ShapeDtypeStruct((B, n_cls), jnp.float32),
        compiler_params=pltpu.CompilerParams(
            dimension_semantics=("arbitrary",)),
    )(scale, imf_n, text_features)


# ----------------------------- params / reference --------------------------- #
def init_params(key, vis_dim, ctx_dim, trans_dim, n_ctx, n_cls, suffix_len):
    ks = jax.random.split(key, 11)

    def lin(k, fan_in, shape):
        return jax.random.normal(k, shape, jnp.float32) / jnp.sqrt(
            jnp.float32(fan_in))

    return dict(
        m_w1=lin(ks[0], vis_dim, (vis_dim, 2 * vis_dim)),
        m_b1=lin(ks[1], vis_dim, (1, 2 * vis_dim)),
        m_w2=lin(ks[2], 2 * vis_dim, (2 * vis_dim, ctx_dim)),
        m_b2=lin(ks[3], 2 * vis_dim, (1, ctx_dim)),
        l1_w=lin(ks[4], trans_dim, (trans_dim, ctx_dim)),
        l1_b=lin(ks[5], trans_dim, (1, ctx_dim)),
        ctx=0.02 * jax.random.normal(ks[6], (n_ctx, ctx_dim), jnp.float32),
        token_prefix=jax.random.normal(ks[7], (n_cls, 1, ctx_dim), jnp.float32),
        token_suffix=jax.random.normal(ks[8], (n_cls, suffix_len, ctx_dim),
                                       jnp.float32),
    )


def reference_forward(imf_top, low_feats, text_features, params, logit_scale):
    imf_n = imf_top / jnp.linalg.norm(imf_top, axis=-1, keepdims=True)
    h = jax.nn.relu(imf_n @ params["m_w1"] + params["m_b1"])
    top_feature = h @ params["m_w2"] + params["m_b2"]
    bias_extra = (jnp.sum(low_feats, axis=0) / 11.0) @ params["l1_w"] \
        + params["l1_b"]

    n_ctx, C = params["ctx"].shape
    half = n_ctx // 2
    B = imf_top.shape[0]
    n_cls = params["token_prefix"].shape[0]
    Ls = params["token_suffix"].shape[1]

    ctx = jnp.broadcast_to(params["ctx"][None], (B, n_ctx, C))
    ctx_shift = ctx.at[:, :half, :].add(bias_extra[:, None, :])
    ctx_shift = ctx_shift.at[:, half:, :].add(top_feature[:, None, :])

    prompts = jnp.concatenate([
        jnp.broadcast_to(params["token_prefix"][None], (B, n_cls, 1, C)),
        jnp.broadcast_to(ctx_shift[:, None], (B, n_cls, n_ctx, C)),
        jnp.broadcast_to(params["token_suffix"][None], (B, n_cls, Ls, C)),
    ], axis=2)

    txt_n = text_features / jnp.linalg.norm(text_features, axis=-1,
                                            keepdims=True)
    logits = jnp.exp(logit_scale) * jnp.einsum('bd,bcd->bc', imf_n, txt_n)
    return prompts, top_feature, imf_n, logits


if __name__ == "__main__":
    B, vis_dim, ctx_dim, trans_dim = 4, 64, 64, 128
    n_ctx, n_cls, suffix_len, n_low = 4, 8, 11, 11

    key = jax.random.PRNGKey(0)
    k_imf, k_low, k_txt, k_par = jax.random.split(key, 4)

    imf_top = jax.random.normal(k_imf, (B, vis_dim), jnp.float32)
    low_feats = jax.random.normal(k_low, (n_low, B, trans_dim), jnp.float32)
    # Stand-in for the pretrained CLIP text encoder's output on the prompts.
    text_features = jax.random.normal(k_txt, (B, n_cls, vis_dim), jnp.float32)
    params = init_params(k_par, vis_dim, ctx_dim, trans_dim, n_ctx, n_cls,
                         suffix_len)
    logit_scale = jnp.float32(jnp.log(1.0 / 0.07))

    prompts, top_feature, imf_n = prompt_learner_forward(imf_top, low_feats,
                                                         params)
    logits = clip_logits(imf_n, text_features, logit_scale)
    jax.block_until_ready((prompts, top_feature, imf_n, logits))

    r_prompts, r_topf, r_imfn, r_logits = reference_forward(
        imf_top, low_feats, text_features, params, logit_scale)

    assert prompts.shape == (B, n_cls, 1 + n_ctx + suffix_len, ctx_dim)
    assert top_feature.shape == (B, ctx_dim)
    assert logits.shape == (B, n_cls)
    assert bool(jnp.allclose(prompts, r_prompts, rtol=2e-2, atol=2e-2))
    assert bool(jnp.allclose(top_feature, r_topf, rtol=2e-2, atol=2e-2))
    assert bool(jnp.allclose(imf_n, r_imfn, rtol=2e-2, atol=2e-2))
    assert bool(jnp.allclose(logits, r_logits, rtol=2e-2, atol=2e-2))

    print("KERNEL_OK")
</pallas_src>

<mosaic_0001>
module attributes {stable_mosaic.version = 11 : i64} {
  func.func @_prompt_kernel(%arg0: i32, %arg1: memref<4x64xf32, #tpu.memory_space<vmem>>, %arg2: memref<11x4x128xf32, #tpu.memory_space<vmem>>, %arg3: memref<64x128xf32, #tpu.memory_space<vmem>>, %arg4: memref<1x128xf32, #tpu.memory_space<vmem>>, %arg5: memref<128x64xf32, #tpu.memory_space<vmem>>, %arg6: memref<1x64xf32, #tpu.memory_space<vmem>>, %arg7: memref<128x64xf32, #tpu.memory_space<vmem>>, %arg8: memref<1x64xf32, #tpu.memory_space<vmem>>, %arg9: memref<4x64xf32, #tpu.memory_space<vmem>>, %arg10: memref<8x64xf32, #tpu.memory_space<vmem>>, %arg11: memref<11x8x64xf32, #tpu.memory_space<vmem>>, %arg12: memref<16x4x8x64xf32, #tpu.memory_space<vmem>>, %arg13: memref<4x64xf32, #tpu.memory_space<vmem>>, %arg14: memref<4x64xf32, #tpu.memory_space<vmem>>) attributes {dimension_semantics = [#tpu.dimension_semantics<arbitrary>], iteration_bounds = array<i64: 1>, scalar_prefetch = 0 : i64, scratch_operands = 0 : i64, tpu.core_type = #tpu.core_type<tc>, window_params = [{pipeline_mode = #tpu.pipeline_mode<synchronous>, transform_indices = @transform_0, window_bounds = array<i64: 4, 64>}, {pipeline_mode = #tpu.pipeline_mode<synchronous>, transform_indices = @transform_1, window_bounds = array<i64: 11, 4, 128>}, {pipeline_mode = #tpu.pipeline_mode<synchronous>, transform_indices = @transform_2, window_bounds = array<i64: 64, 128>}, {pipeline_mode = #tpu.pipeline_mode<synchronous>, transform_indices = @transform_3, window_bounds = array<i64: 1, 128>}, {pipeline_mode = #tpu.pipeline_mode<synchronous>, transform_indices = @transform_4, window_bounds = array<i64: 128, 64>}, {pipeline_mode = #tpu.pipeline_mode<synchronous>, transform_indices = @transform_5, window_bounds = array<i64: 1, 64>}, {pipeline_mode = #tpu.pipeline_mode<synchronous>, transform_indices = @transform_6, window_bounds = array<i64: 128, 64>}, {pipeline_mode = #tpu.pipeline_mode<synchronous>, transform_indices = @transform_7, window_bounds = array<i64: 1, 64>}, {pipeline_mode = #tpu.pipeline_mode<synchronous>, transform_indices = @transform_8, window_bounds = array<i64: 4, 64>}, {pipeline_mode = #tpu.pipeline_mode<synchronous>, transform_indices = @transform_9, window_bounds = array<i64: 8, 64>}, {pipeline_mode = #tpu.pipeline_mode<synchronous>, transform_indices = @transform_10, window_bounds = array<i64: 11, 8, 64>}, {pipeline_mode = #tpu.pipeline_mode<synchronous>, transform_indices = @transform_11, window_bounds = array<i64: 16, 4, 8, 64>}, {pipeline_mode = #tpu.pipeline_mode<synchronous>, transform_indices = @transform_12, window_bounds = array<i64: 4, 64>}, {pipeline_mode = #tpu.pipeline_mode<synchronous>, transform_indices = @transform_13, window_bounds = array<i64: 4, 64>}]} {
    %c0 = arith.constant 0 : index
    %c0_0 = arith.constant 0 : index
    %0 = vector.load %arg1[%c0, %c0_0] : memref<4x64xf32, #tpu.memory_space<vmem>>, vector<4x64xf32>
    %1 = arith.mulf %0, %0 : vector<4x64xf32>
    %cst = arith.constant dense<0.000000e+00> : vector<4xf32>
    %2 = vector.multi_reduction <add>, %1, %cst [1] : vector<4x64xf32> to vector<4xf32>
    %3 = vector.shape_cast %2 : vector<4xf32> to vector<4x1xf32>
    %4 = math.rsqrt %3 : vector<4x1xf32>
    %5 = vector.broadcast %4 : vector<4x1xf32> to vector<4x64xf32>
    %6 = arith.mulf %0, %5 : vector<4x64xf32>
    %c0_1 = arith.constant 0 : index
    %c0_2 = arith.constant 0 : index
    %7 = vector.load %arg14[%c0_1, %c0_2] : memref<4x64xf32, #tpu.memory_space<vmem>>, vector<4x64xf32>
    tpu.vector_store %arg14[%c0_1, %c0_2], %6 {strides = array<i32>} : memref<4x64xf32, #tpu.memory_space<vmem>>, vector<4x64xf32>,
    %c0_3 = arith.constant 0 : index
    %c0_4 = arith.constant 0 : index
    %8 = vector.load %arg3[%c0_3, %c0_4] : memref<64x128xf32, #tpu.memory_space<vmem>>, vector<64x128xf32>
    %cst_5 = arith.constant dense<0.000000e+00> : vector<4x128xf32>
    %9 = tpu.matmul %6, %8, %cst_5 {dimension_numbers = #tpu.dot_dimension_numbers<[1], [0], [0], [1], [0, 0, 1, 1], [], []>} : vector<4x64xf32>, vector<64x128xf32>, vector<4x128xf32> -> vector<4x128xf32>
    %c0_6 = arith.constant 0 : index
    %c0_7 = arith.constant 0 : index
    %10 = vector.load %arg4[%c0_6, %c0_7] : memref<1x128xf32, #tpu.memory_space<vmem>>, vector<1x128xf32>
    %11 = vector.broadcast %10 : vector<1x128xf32> to vector<4x128xf32>
    %12 = arith.addf %9, %11 : vector<4x128xf32>
    %cst_8 = arith.constant 0.000000e+00 : f32
    %13 = vector.broadcast %cst_8 : f32 to vector<4x128xf32>
    %14 = arith.maximumf %12, %13 : vector<4x128xf32>
    %c0_9 = arith.constant 0 : index
    %c0_10 = arith.constant 0 : index
    %15 = vector.load %arg5[%c0_9, %c0_10] : memref<128x64xf32, #tpu.memory_space<vmem>>, vector<128x64xf32>
    %cst_11 = arith.constant dense<0.000000e+00> : vector<4x64xf32>
    %16 = tpu.matmul %14, %15, %cst_11 {dimension_numbers = #tpu.dot_dimension_numbers<[1], [0], [0], [1], [0, 0, 1, 1], [], []>} : vector<4x128xf32>, vector<128x64xf32>, vector<4x64xf32> -> vector<4x64xf32>
    %c0_12 = arith.constant 0 : index
    %c0_13 = arith.constant 0 : index
    %17 = vector.load %arg6[%c0_12, %c0_13] : memref<1x64xf32, #tpu.memory_space<vmem>>, vector<1x64xf32>
    %18 = vector.broadcast %17 : vector<1x64xf32> to vector<4x64xf32>
    %19 = arith.addf %16, %18 : vector<4x64xf32>
    %c0_14 = arith.constant 0 : index
    %c0_15 = arith.constant 0 : index
    %20 = vector.load %arg13[%c0_14, %c0_15] : memref<4x64xf32, #tpu.memory_space<vmem>>, vector<4x64xf32>
    tpu.vector_store %arg13[%c0_14, %c0_15], %19 {strides = array<i32>} : memref<4x64xf32, #tpu.memory_space<vmem>>, vector<4x64xf32>,
    %c0_16 = arith.constant 0 : index
    %c0_17 = arith.constant 0 : index
    %c0_18 = arith.constant 0 : index
    %21 = vector.load %arg2[%c0_16, %c0_17, %c0_18] : memref<11x4x128xf32, #tpu.memory_space<vmem>>, vector<11x4x128xf32>
    %cst_19 = arith.constant dense<0.000000e+00> : vector<4x128xf32>
    %22 = vector.multi_reduction <add>, %21, %cst_19 [0] : vector<11x4x128xf32> to vector<4x128xf32>
    %cst_20 = arith.constant 0.0909090936 : f32
    %23 = vector.broadcast %cst_20 : f32 to vector<4x128xf32>
    %24 = arith.mulf %22, %23 : vector<4x128xf32>
    %c0_21 = arith.constant 0 : index
    %c0_22 = arith.constant 0 : index
    %25 = vector.load %arg7[%c0_21, %c0_22] : memref<128x64xf32, #tpu.memory_space<vmem>>, vector<128x64xf32>
    %cst_23 = arith.constant dense<0.000000e+00> : vector<4x64xf32>
    %26 = tpu.matmul %24, %25, %cst_23 {dimension_numbers = #tpu.dot_dimension_numbers<[1], [0], [0], [1], [0, 0, 1, 1], [], []>} : vector<4x128xf32>, vector<128x64xf32>, vector<4x64xf32> -> vector<4x64xf32>
    %c0_24 = arith.constant 0 : index
    %c0_25 = arith.constant 0 : index
    %27 = vector.load %arg8[%c0_24, %c0_25] : memref<1x64xf32, #tpu.memory_space<vmem>>, vector<1x64xf32>
    %28 = vector.broadcast %27 : vector<1x64xf32> to vector<4x64xf32>
    %29 = arith.addf %26, %28 : vector<4x64xf32>
    %c0_26 = arith.constant 0 : index
    %c0_27 = arith.constant 0 : index
    %30 = vector.load %arg10[%c0_26, %c0_27] : memref<8x64xf32, #tpu.memory_space<vmem>>, vector<8x64xf32>
    %31 = vector.shape_cast %30 : vector<8x64xf32> to vector<1x8x64xf32>
    %32 = vector.shape_cast %31 : vector<1x8x64xf32> to vector<1x8x64xf32>
    %33 = vector.broadcast %32 : vector<1x8x64xf32> to vector<4x8x64xf32>
    %c0_28 = arith.constant 0 : index
    %c0_29 = arith.constant 0 : index
    %c0_30 = arith.constant 0 : index
    %c0_31 = arith.constant 0 : index
    %34 = vector.load %arg12[%c0_28, %c0_29, %c0_30, %c0_31] : memref<16x4x8x64xf32, #tpu.memory_space<vmem>>, vector<1x4x8x64xf32>
    %35 = vector.shape_cast %34 : vector<1x4x8x64xf32> to vector<4x8x64xf32>
    %36 = vector.shape_cast %33 : vector<4x8x64xf32> to vector<1x4x8x64xf32>
    tpu.vector_store %arg12[%c0_28, %c0_29, %c0_30, %c0_31], %36 {strides = array<i32>} : memref<16x4x8x64xf32, #tpu.memory_space<vmem>>, vector<1x4x8x64xf32>,
    %c0_32 = arith.constant 0 : index
    %c0_33 = arith.constant 0 : index
    %37 = vector.load %arg9[%c0_32, %c0_33] : memref<4x64xf32, #tpu.memory_space<vmem>>, vector<4x64xf32>
    %38 = vector.extract_strided_slice %37 {offsets = [0, 0], sizes = [1, 64], strides = [1, 1]} : vector<4x64xf32> to vector<1x64xf32>
    %39 = vector.broadcast %38 : vector<1x64xf32> to vector<4x64xf32>
    %40 = arith.addf %39, %29 : vector<4x64xf32>
    %41 = vector.shape_cast %40 : vector<4x64xf32> to vector<4x1x64xf32>
    %42 = vector.shape_cast %41 : vector<4x1x64xf32> to vector<4x1x64xf32>
    %43 = vector.broadcast %42 : vector<4x1x64xf32> to vector<4x8x64xf32>
    %c1 = arith.constant 1 : index
    %c0_34 = arith.constant 0 : index
    %c0_35 = arith.constant 0 : index
    %c0_36 = arith.constant 0 : index
    %44 = vector.load %arg12[%c1, %c0_34, %c0_35, %c0_36] : memref<16x4x8x64xf32, #tpu.memory_space<vmem>>, vector<1x4x8x64xf32>
    %45 = vector.shape_cast %44 : vector<1x4x8x64xf32> to vector<4x8x64xf32>
    %46 = vector.shape_cast %43 : vector<4x8x64xf32> to vector<1x4x8x64xf32>
    tpu.vector_store %arg12[%c1, %c0_34, %c0_35, %c0_36], %46 {strides = array<i32>} : memref<16x4x8x64xf32, #tpu.memory_space<vmem>>, vector<1x4x8x64xf32>,
    %47 = vector.extract_strided_slice %37 {offsets = [1, 0], sizes = [1, 64], strides = [1, 1]} : vector<4x64xf32> to vector<1x64xf32>
    %48 = vector.broadcast %47 : vector<1x64xf32> to vector<4x64xf32>
    %49 = arith.addf %48, %29 : vector<4x64xf32>
    %50 = vector.shape_cast %49 : vector<4x64xf32> to vector<4x1x64xf32>
    %51 = vector.shape_cast %50 : vector<4x1x64xf32> to vector<4x1x64xf32>
    %52 = vector.broadcast %51 : vector<4x1x64xf32> to vector<4x8x64xf32>
    %c2 = arith.constant 2 : index
    %c0_37 = arith.constant 0 : index
    %c0_38 = arith.constant 0 : index
    %c0_39 = arith.constant 0 : index
    %53 = vector.load %arg12[%c2, %c0_37, %c0_38, %c0_39] : memref<16x4x8x64xf32, #tpu.memory_space<vmem>>, vector<1x4x8x64xf32>
    %54 = vector.shape_cast %53 : vector<1x4x8x64xf32> to vector<4x8x64xf32>
    %55 = vector.shape_cast %52 : vector<4x8x64xf32> to vector<1x4x8x64xf32>
    tpu.vector_store %arg12[%c2, %c0_37, %c0_38, %c0_39], %55 {strides = array<i32>} : memref<16x4x8x64xf32, #tpu.memory_space<vmem>>, vector<1x4x8x64xf32>,
    %56 = vector.extract_strided_slice %37 {offsets = [2, 0], sizes = [1, 64], strides = [1, 1]} : vector<4x64xf32> to vector<1x64xf32>
    %57 = vector.broadcast %56 : vector<1x64xf32> to vector<4x64xf32>
    %58 = arith.addf %57, %19 : vector<4x64xf32>
    %59 = vector.shape_cast %58 : vector<4x64xf32> to vector<4x1x64xf32>
    %60 = vector.shape_cast %59 : vector<4x1x64xf32> to vector<4x1x64xf32>
    %61 = vector.broadcast %60 : vector<4x1x64xf32> to vector<4x8x64xf32>
    %c3 = arith.constant 3 : index
    %c0_40 = arith.constant 0 : index
    %c0_41 = arith.constant 0 : index
    %c0_42 = arith.constant 0 : index
    %62 = vector.load %arg12[%c3, %c0_40, %c0_41, %c0_42] : memref<16x4x8x64xf32, #tpu.memory_space<vmem>>, vector<1x4x8x64xf32>
    %63 = vector.shape_cast %62 : vector<1x4x8x64xf32> to vector<4x8x64xf32>
    %64 = vector.shape_cast %61 : vector<4x8x64xf32> to vector<1x4x8x64xf32>
    tpu.vector_store %arg12[%c3, %c0_40, %c0_41, %c0_42], %64 {strides = array<i32>} : memref<16x4x8x64xf32, #tpu.memory_space<vmem>>, vector<1x4x8x64xf32>,
    %65 = vector.extract_strided_slice %37 {offsets = [3, 0], sizes = [1, 64], strides = [1, 1]} : vector<4x64xf32> to vector<1x64xf32>
    %66 = vector.broadcast %65 : vector<1x64xf32> to vector<4x64xf32>
    %67 = arith.addf %66, %19 : vector<4x64xf32>
    %68 = vector.shape_cast %67 : vector<4x64xf32> to vector<4x1x64xf32>
    %69 = vector.shape_cast %68 : vector<4x1x64xf32> to vector<4x1x64xf32>
    %70 = vector.broadcast %69 : vector<4x1x64xf32> to vector<4x8x64xf32>
    %c4 = arith.constant 4 : index
    %c0_43 = arith.constant 0 : index
    %c0_44 = arith.constant 0 : index
    %c0_45 = arith.constant 0 : index
    %71 = vector.load %arg12[%c4, %c0_43, %c0_44, %c0_45] : memref<16x4x8x64xf32, #tpu.memory_space<vmem>>, vector<1x4x8x64xf32>
    %72 = vector.shape_cast %71 : vector<1x4x8x64xf32> to vector<4x8x64xf32>
    %73 = vector.shape_cast %70 : vector<4x8x64xf32> to vector<1x4x8x64xf32>
    tpu.vector_store %arg12[%c4, %c0_43, %c0_44, %c0_45], %73 {strides = array<i32>} : memref<16x4x8x64xf32, #tpu.memory_space<vmem>>, vector<1x4x8x64xf32>,
    %c0_46 = arith.constant 0 : index
    %c0_47 = arith.constant 0 : index
    %c0_48 = arith.constant 0 : index
    %74 = vector.load %arg11[%c0_46, %c0_47, %c0_48] : memref<11x8x64xf32, #tpu.memory_space<vmem>>, vector<11x8x64xf32>
    %75 = vector.shape_cast %74 : vector<11x8x64xf32> to vector<11x1x8x64xf32>
    %76 = vector.shape_cast %75 : vector<11x1x8x64xf32> to vector<11x1x8x64xf32>
    %77 = vector.broadcast %76 : vector<11x1x8x64xf32> to vector<11x4x8x64xf32>
    %c5 = arith.constant 5 : index
    %c0_49 = arith.constant 0 : index
    %c0_50 = arith.constant 0 : index
    %c0_51 = arith.constant 0 : index
    %78 = vector.load %arg12[%c5, %c0_49, %c0_50, %c0_51] : memref<16x4x8x64xf32, #tpu.memory_space<vmem>>, vector<11x4x8x64xf32>
    tpu.vector_store %arg12[%c5, %c0_49, %c0_50, %c0_51], %77 {strides = array<i32>} : memref<16x4x8x64xf32, #tpu.memory_space<vmem>>, vector<11x4x8x64xf32>,
    return
  }
  func.func @transform_0(%arg0: i32) -> (i32, i32) {
    %c0_i32 = arith.constant 0 : i32
    %c0_i32_0 = arith.constant 0 : i32
    %c0_i32_1 = arith.constant 0 : i32
    return %c0_i32, %c0_i32_0 : i32, i32
  }
  func.func @transform_1(%arg0: i32) -> (i32, i32, i32) {
    %c0_i32 = arith.constant 0 : i32
    %c0_i32_0 = arith.constant 0 : i32
    %c0_i32_1 = arith.constant 0 : i32
    %c0_i32_2 = arith.constant 0 : i32
    return %c0_i32, %c0_i32_0, %c0_i32_1 : i32, i32, i32
  }
  func.func @transform_2(%arg0: i32) -> (i32, i32) {
    %c0_i32 = arith.constant 0 : i32
    %c0_i32_0 = arith.constant 0 : i32
    %c0_i32_1 = arith.constant 0 : i32
    return %c0_i32, %c0_i32_0 : i32, i32
  }
  func.func @transform_3(%arg0: i32) -> (i32, i32) {
    %c0_i32 = arith.constant 0 : i32
    %c0_i32_0 = arith.constant 0 : i32
    %c0_i32_1 = arith.constant 0 : i32
    return %c0_i32, %c0_i32_0 : i32, i32
  }
  func.func @transform_4(%arg0: i32) -> (i32, i32) {
    %c0_i32 = arith.constant 0 : i32
    %c0_i32_0 = arith.constant 0 : i32
    %c0_i32_1 = arith.constant 0 : i32
    return %c0_i32, %c0_i32_0 : i32, i32
  }
  func.func @transform_5(%arg0: i32) -> (i32, i32) {
    %c0_i32 = arith.constant 0 : i32
    %c0_i32_0 = arith.constant 0 : i32
    %c0_i32_1 = arith.constant 0 : i32
    return %c0_i32, %c0_i32_0 : i32, i32
  }
  func.func @transform_6(%arg0: i32) -> (i32, i32) {
    %c0_i32 = arith.constant 0 : i32
    %c0_i32_0 = arith.constant 0 : i32
    %c0_i32_1 = arith.constant 0 : i32
    return %c0_i32, %c0_i32_0 : i32, i32
  }
  func.func @transform_7(%arg0: i32) -> (i32, i32) {
    %c0_i32 = arith.constant 0 : i32
    %c0_i32_0 = arith.constant 0 : i32
    %c0_i32_1 = arith.constant 0 : i32
    return %c0_i32, %c0_i32_0 : i32, i32
  }
  func.func @transform_8(%arg0: i32) -> (i32, i32) {
    %c0_i32 = arith.constant 0 : i32
    %c0_i32_0 = arith.constant 0 : i32
    %c0_i32_1 = arith.constant 0 : i32
    return %c0_i32, %c0_i32_0 : i32, i32
  }
  func.func @transform_9(%arg0: i32) -> (i32, i32) {
    %c0_i32 = arith.constant 0 : i32
    %c0_i32_0 = arith.constant 0 : i32
    %c0_i32_1 = arith.constant 0 : i32
    return %c0_i32, %c0_i32_0 : i32, i32
  }
  func.func @transform_10(%arg0: i32) -> (i32, i32, i32) {
    %c0_i32 = arith.constant 0 : i32
    %c0_i32_0 = arith.constant 0 : i32
    %c0_i32_1 = arith.constant 0 : i32
    %c0_i32_2 = arith.constant 0 : i32
    return %c0_i32, %c0_i32_0, %c0_i32_1 : i32, i32, i32
  }
  func.func @transform_11(%arg0: i32) -> (i32, i32, i32, i32) {
    %c0_i32 = arith.constant 0 : i32
    %c0_i32_0 = arith.constant 0 : i32
    %c0_i32_1 = arith.constant 0 : i32
    %c0_i32_2 = arith.constant 0 : i32
    %c0_i32_3 = arith.constant 0 : i32
    return %c0_i32, %c0_i32_0, %c0_i32_1, %c0_i32_2 : i32, i32, i32, i32
  }
  func.func @transform_12(%arg0: i32) -> (i32, i32) {
    %c0_i32 = arith.constant 0 : i32
    %c0_i32_0 = arith.constant 0 : i32
    %c0_i32_1 = arith.constant 0 : i32
    return %c0_i32, %c0_i32_0 : i32, i32
  }
  func.func @transform_13(%arg0: i32) -> (i32, i32) {
    %c0_i32 = arith.constant 0 : i32
    %c0_i32_0 = arith.constant 0 : i32
    %c0_i32_1 = arith.constant 0 : i32
    return %c0_i32, %c0_i32_0 : i32, i32
  }
}

</mosaic_0001>

<llo_original>
// kernel: tpu_custom_call.1
$region0: #{tpu_custom_call.1}
  #allocation0 [shape = 'u32[]', space=smem, size = 0x4, offset = 0x4, fixed_abs, tag = 'smem constant byte address 0x4 - core index']
  #allocation1 [shape = 'u32[144,128]{1,0:T(1,128)}', space=vmem, size = 0x12000, scoped, tag = 'internal scratch']
  %s0 = inlined_call_operand.vmem [shape: f32[4,64], index: 0, kind: input, shape index: {}]
  %s1 = inlined_call_operand.vmem [shape: f32[11,4,128], index: 1, kind: input, shape index: {}]
  %s2 = inlined_call_operand.vmem [shape: f32[64,128], index: 2, kind: input, shape index: {}]
  %s3 = inlined_call_operand.vmem [shape: f32[1,128], index: 3, kind: input, shape index: {}]
  %s4 = inlined_call_operand.vmem [shape: f32[128,64], index: 4, kind: input, shape index: {}]
  %s5 = inlined_call_operand.vmem [shape: f32[1,64], index: 5, kind: input, shape index: {}]
  %s6 = inlined_call_operand.vmem [shape: f32[128,64], index: 6, kind: input, shape index: {}]
  %s7 = inlined_call_operand.vmem [shape: f32[1,64], index: 7, kind: input, shape index: {}]
  %s8 = inlined_call_operand.vmem [shape: f32[4,64], index: 8, kind: input, shape index: {}]
  %s9 = inlined_call_operand.vmem [shape: f32[8,64], index: 9, kind: input, shape index: {}]
  %s10 = inlined_call_operand.vmem [shape: f32[11,8,64], index: 10, kind: input, shape index: {}]
  %s11 = inlined_call_operand.hbm [shape: f32[16,4,8,64], index: 11, kind: output, shape index: {0}]
  %s12 = inlined_call_operand.hbm [shape: f32[4,64], index: 12, kind: output, shape index: {1}]
  %s13 = inlined_call_operand.hbm [shape: f32[4,64], index: 13, kind: output, shape index: {2}]
  %14 = xla_tuple %s11, %s12, %s13
  %s15 = sld [smem:[#allocation0]]
  $region70: #{tpu_custom_call.1} parent=0
    _
  %s17 = ssub.s32 1, %s15
  %s18 = scalar_select 0, %s17, %s15
  $region1: #{tpu_custom_call.1} parent=0
    #allocation2 [shape = 'u8[262144]{0}', space=vmem, size = 0x40000, scoped, tag = 'output window, operand 0, single buffered']
    #allocation3 [shape = 's32[1]{0}', space=sflag, size = 0x4, scoped, tag = 'scoped memory for tpu_custom_call.1']
    #allocation4 [shape = 'u8[2048]{0}', space=vmem, size = 0x800, scoped, tag = 'output window, operand 1, single buffered']
    #allocation5 [shape = 's32[1]{0}', space=sflag, size = 0x4, scoped, tag = 'scoped memory for tpu_custom_call.1']
    #allocation6 [shape = 'u8[2048]{0}', space=vmem, size = 0x800, scoped, tag = 'output window, operand 2, single buffered']
    %19 = vsyncpa [#allocation3], 0
    %20 = vsyncpa [#allocation5], 0
    // Predicated region
    $region2: #{tpu_custom_call.1} parent=1 // pred_check
      _
    $region3: #{tpu_custom_call.1} parent=1 // pred_check_branch
      %22 = sbr.rel (0) target = $region5
    $region4: #{tpu_custom_call.1} parent=1 // pred_region
      _
    $region5: #{tpu_custom_call.1} parent=1 // pred_fallthru
      _
    // Predicated region
    $region6: #{tpu_custom_call.1} parent=1 // pred_check
      _
    $region7: #{tpu_custom_call.1} parent=1 // pred_check_branch
      %24 = sbr.rel (0) target = $region9
    $region8: #{tpu_custom_call.1} parent=1 // pred_region
      _
    $region9: #{tpu_custom_call.1} parent=1 // pred_fallthru
      _
    // Predicated region
    $region10: #{tpu_custom_call.1} parent=1 // pred_check
      _
    $region11: #{tpu_custom_call.1} parent=1 // pred_check_branch
      %26 = sbr.rel (0) target = $region13
    $region12: #{tpu_custom_call.1} parent=1 // pred_region
      _
    $region13: #{tpu_custom_call.1} parent=1 // pred_fallthru
      _
    // Predicated region
    $region14: #{tpu_custom_call.1} parent=1 // pred_check
      _
    $region15: #{tpu_custom_call.1} parent=1 // pred_check_branch
      %28 = sbr.rel (0) target = $region17
    $region16: #{tpu_custom_call.1} parent=1 // pred_region
      _
    $region17: #{tpu_custom_call.1} parent=1 // pred_fallthru
      _
    // Predicated region
    $region18: #{tpu_custom_call.1} parent=1 // pred_check
      _
    $region19: #{tpu_custom_call.1} parent=1 // pred_check_branch
      %30 = sbr.rel (0) target = $region21
    $region20: #{tpu_custom_call.1} parent=1 // pred_region
      _
    $region21: #{tpu_custom_call.1} parent=1 // pred_fallthru
      _
    // Predicated region
    $region22: #{tpu_custom_call.1} parent=1 // pred_check
      _
    $region23: #{tpu_custom_call.1} parent=1 // pred_check_branch
      %32 = sbr.rel (0) target = $region25
    $region24: #{tpu_custom_call.1} parent=1 // pred_region
      _
    $region25: #{tpu_custom_call.1} parent=1 // pred_fallthru
      _
    // Predicated region
    $region26: #{tpu_custom_call.1} parent=1 // pred_check
      _
    $region27: #{tpu_custom_call.1} parent=1 // pred_check_branch
      %34 = sbr.rel (0) target = $region29
    $region28: #{tpu_custom_call.1} parent=1 // pred_region
      _
    $region29: #{tpu_custom_call.1} parent=1 // pred_fallthru
      _
    // Predicated region
    $region30: #{tpu_custom_call.1} parent=1 // pred_check
      _
    $region31: #{tpu_custom_call.1} parent=1 // pred_check_branch
      %36 = sbr.rel (0) target = $region33
    $region32: #{tpu_custom_call.1} parent=1 // pred_region
      _
    $region33: #{tpu_custom_call.1} parent=1 // pred_fallthru
      _
    // Predicated region
    $region34: #{tpu_custom_call.1} parent=1 // pred_check
      _
    $region35: #{tpu_custom_call.1} parent=1 // pred_check_branch
      %38 = sbr.rel (0) target = $region37
    $region36: #{tpu_custom_call.1} parent=1 // pred_region
      _
    $region37: #{tpu_custom_call.1} parent=1 // pred_fallthru
      _
    // Predicated region
    $region38: #{tpu_custom_call.1} parent=1 // pred_check
      _
    $region39: #{tpu_custom_call.1} parent=1 // pred_check_branch
      %40 = sbr.rel (0) target = $region41
    $region40: #{tpu_custom_call.1} parent=1 // pred_region
      _
    $region41: #{tpu_custom_call.1} parent=1 // pred_fallthru
      _
    // Predicated region
    $region42: #{tpu_custom_call.1} parent=1 // pred_check
      _
    $region43: #{tpu_custom_call.1} parent=1 // pred_check_branch
      %42 = sbr.rel (0) target = $region45
    $region44: #{tpu_custom_call.1} parent=1 // pred_region
      _
    $region45: #{tpu_custom_call.1} parent=1 // pred_fallthru
      _
    %v43 = vld [vmem:[%s0] sm:$0xf]
    %v44 = vmul.f32 %v43, %v43
    %vm45 = vcmask 519168
    %v46 = vsel %vm45, %v44, 0.0
    %47 = vadd.xlane.f32.xlu0 %v46
    %v48 = vpop.xlane.xlu0 %47
    %v49 = vrsqrt.pop %v48
    %v50 = vmul.f32 %v43, %v49
    %51 = vst.msk [vmem:[#allocation6] sm:$0xf] %vm45, %v50
    %v52 = vld [vmem:[%s2] sm:$0xff]
    %v53 = vld [vmem:[%s2 + $0x8] sm:$0xff]
    %v54 = vld [vmem:[%s2 + $0x10] sm:$0xff]
    %v55 = vld [vmem:[%s2 + $0x18] sm:$0xff]
    %v56 = vld [vmem:[%s2 + $0x20] sm:$0xff]
    %v57 = vld [vmem:[%s2 + $0x28] sm:$0xff]
    %v58 = vld [vmem:[%s2 + $0x30] sm:$0xff]
    %v59 = vld [vmem:[%s2 + $0x38] sm:$0xff]
    %v60 = vld [vmem:[%s3] sm:$0x1]
    %v62 = vlaneseq
    %v63 = vshrl.u32 %v62, 7
    %v64 = vsub.s32 0, %v63
    %v65 = vrot.slane %v60, %v64
    %vm67 = vcmask 523264
    %v69 = vsel %vm67, %v50, 0
    %71 = vmatprep.subr.mxu0 0.0
    %72 = vmatpush1.msra.mxu0 %v52
    %73 = vmatprep.subr.mxu0 0.0
    %74 = vmatpush1.msra.mxu0 %v53
    %75 = vmatprep.subr.mxu0 0.0
    %76 = vmatpush1.msra.mxu0 %v54
    %77 = vmatprep.subr.mxu0 0.0
    %78 = vmatpush1.msra.mxu0 %v55
    %79 = vmatprep.subr.mxu0 0.0
    %80 = vmatpush1.msra.mxu0 %v56
    %81 = vmatprep.subr.mxu0 0.0
    %82 = vmatpush1.msra.mxu0 %v57
    %83 = vmatprep.subr.mxu0 0.0
    %84 = vmatpush1.msra.mxu0 %v58
    %85 = vmatprep.subr.mxu0 0.0
    %86 = vmatpush1.msra.mxu0 %v59
    %87 = vmatprep.subr.mxu0 0.0
    %88 = vmatpush1.msra.mxu0 0.0
    %89 = vmatprep.subr.mxu0 0.0
    %90 = vmatpush1.msra.mxu0 0.0
    %91 = vmatprep.subr.mxu0 0.0
    %92 = vmatpush1.msra.mxu0 0.0
    %93 = vmatprep.subr.mxu0 0.0
    %94 = vmatpush1.msra.mxu0 0.0
    %95 = vmatprep.subr.mxu0 0.0
    %96 = vmatpush1.msra.mxu0 0.0
    %97 = vmatprep.subr.mxu0 0.0
    %98 = vmatpush1.msra.mxu0 0.0
    %99 = vmatprep.subr.mxu0 0.0
    %100 = vmatpush1.msra.mxu0 0.0
    %101 = vmatprep.subr.mxu0 0.0
    %102 = vmatpush1.msra.mxu0 0.0
    %103 = vmatprep.subr.mxu0 0.0
    %104 = vmatpush1.msra.mxu0 0.0
    %105 = vmatprep.subr.mxu0 0.0
    %106 = vmatpush1.msra.mxu0 0.0
    %107 = vmatprep.subr.mxu0 0.0
    %108 = vmatpush1.msra.mxu0 0.0
    %109 = vmatprep.subr.mxu0 0.0
    %110 = vmatpush1.msra.mxu0 0.0
    %111 = vmatprep.subr.mxu0 0.0
    %112 = vmatpush1.msra.mxu0 0.0
    %113 = vmatprep.subr.mxu0 0.0
    %114 = vmatpush1.msra.mxu0 0.0
    %115 = vmatprep.subr.mxu0 0.0
    %116 = vmatpush1.msra.mxu0 0.0
    %117 = vmatprep.subr.mxu0 0.0
    %118 = vmatpush1.msra.mxu0 0.0
    %119 = vmatprep.subr.mxu0 0.0
    %120 = vmatpush1.msra.mxu0 0.0
    %121 = vmatprep.subr.mxu0 0.0
    %122 = vmatpush1.msra.mxu0 0.0
    %123 = vmatprep.subr.mxu0 0.0
    %124 = vmatpush1.msra.mxu0 0.0
    %125 = vmatprep.subr.mxu0 0.0
    %126 = vmatpush1.msra.mxu0 0.0
    %127 = vmatprep.subr.mxu0 0.0
    %128 = vmatpush1.msra.mxu0 0.0
    %129 = vmatprep.subr.mxu0 0.0
    %130 = vmatpush1.msra.mxu0 0.0
    %131 = vmatprep.subr.mxu0 0.0
    %132 = vmatpush1.msra.mxu0 0.0
    %133 = vmatprep.subr.mxu0 0.0
    %134 = vmatpush1.msra.mxu0 0.0
    %135 = vmatprep.mubr.f32.mxu0 0.0
    %136 = vmatmul.mubr.f32.gmra.mrb[0].mxu0 %v69
    %v137 = vpop.f32.mrb[0].mxu0
    %v138 = vadd.f32 %v65, %v137
    %v139 = vpop.f32.mrb[0].mxu0
    %140 = vdwg.mxu0
    %v141 = vmax.f32 %v138, 0.0
    %v142 = vld [vmem:[%s4] sm:$0xff]
    %v143 = vld [vmem:[%s4 + $0x8] sm:$0xff]
    %v144 = vld [vmem:[%s4 + $0x10] sm:$0xff]
    %v145 = vld [vmem:[%s4 + $0x18] sm:$0xff]
    %v146 = vld [vmem:[%s4 + $0x20] sm:$0xff]
    %v147 = vld [vmem:[%s4 + $0x28] sm:$0xff]
    %v148 = vld [vmem:[%s4 + $0x30] sm:$0xff]
    %v149 = vld [vmem:[%s4 + $0x38] sm:$0xff]
    %v150 = vld [vmem:[%s4 + $0x40] sm:$0xff]
    %v151 = vld [vmem:[%s4 + $0x48] sm:$0xff]
    %v152 = vld [vmem:[%s4 + $0x50] sm:$0xff]
    %v153 = vld [vmem:[%s4 + $0x58] sm:$0xff]
    %v154 = vld [vmem:[%s4 + $0x60] sm:$0xff]
    %v155 = vld [vmem:[%s4 + $0x68] sm:$0xff]
    %v156 = vld [vmem:[%s4 + $0x70] sm:$0xff]
    %v157 = vld [vmem:[%s4 + $0x78] sm:$0xff]
    %v158 = vld [vmem:[%s5] sm:$0x1]
    %v160 = vlaneseq
    %v161 = vshrl.u32 %v160, 7
    %v162 = vsub.s32 0, %v161
    %v163 = vrot.slane %v158, %v162
    %165 = vmatprep.subr.mxu0 0.0
    %166 = vmatpush1.msra.mxu0 %v142
    %167 = vmatprep.subr.mxu0 0.0
    %168 = vmatpush1.msra.mxu0 %v143
    %169 = vmatprep.subr.mxu0 0.0
    %170 = vmatpush1.msra.mxu0 %v144
    %171 = vmatprep.subr.mxu0 0.0
    %172 = vmatpush1.msra.mxu0 %v145
    %173 = vmatprep.subr.mxu0 0.0
    %174 = vmatpush1.msra.mxu0 %v146
    %175 = vmatprep.subr.mxu0 0.0
    %176 = vmatpush1.msra.mxu0 %v147
    %177 = vmatprep.subr.mxu0 0.0
    %178 = vmatpush1.msra.mxu0 %v148
    %179 = vmatprep.subr.mxu0 0.0
    %180 = vmatpush1.msra.mxu0 %v149
    %181 = vmatprep.subr.mxu0 0.0
    %182 = vmatpush1.msra.mxu0 %v150
    %183 = vmatprep.subr.mxu0 0.0
    %184 = vmatpush1.msra.mxu0 %v151
    %185 = vmatprep.subr.mxu0 0.0
    %186 = vmatpush1.msra.mxu0 %v152
    %187 = vmatprep.subr.mxu0 0.0
    %188 = vmatpush1.msra.mxu0 %v153
    %189 = vmatprep.subr.mxu0 0.0
    %190 = vmatpush1.msra.mxu0 %v154
    %191 = vmatprep.subr.mxu0 0.0
    %192 = vmatpush1.msra.mxu0 %v155
    %193 = vmatprep.subr.mxu0 0.0
    %194 = vmatpush1.msra.mxu0 %v156
    %195 = vmatprep.subr.mxu0 0.0
    %196 = vmatpush1.msra.mxu0 %v157
    %197 = vmatprep.subr.mxu0 0.0
    %198 = vmatpush1.msra.mxu0 0.0
    %199 = vmatprep.subr.mxu0 0.0
    %200 = vmatpush1.msra.mxu0 0.0
    %201 = vmatprep.subr.mxu0 0.0
    %202 = vmatpush1.msra.mxu0 0.0
    %203 = vmatprep.subr.mxu0 0.0
    %204 = vmatpush1.msra.mxu0 0.0
    %205 = vmatprep.subr.mxu0 0.0
    %206 = vmatpush1.msra.mxu0 0.0
    %207 = vmatprep.subr.mxu0 0.0
    %208 = vmatpush1.msra.mxu0 0.0
    %209 = vmatprep.subr.mxu0 0.0
    %210 = vmatpush1.msra.mxu0 0.0
    %211 = vmatprep.subr.mxu0 0.0
    %212 = vmatpush1.msra.mxu0 0.0
    %213 = vmatprep.subr.mxu0 0.0
    %214 = vmatpush1.msra.mxu0 0.0
    %215 = vmatprep.subr.mxu0 0.0
    %216 = vmatpush1.msra.mxu0 0.0
    %217 = vmatprep.subr.mxu0 0.0
    %218 = vmatpush1.msra.mxu0 0.0
    %219 = vmatprep.subr.mxu0 0.0
    %220 = vmatpush1.msra.mxu0 0.0
    %221 = vmatprep.subr.mxu0 0.0
    %222 = vmatpush1.msra.mxu0 0.0
    %223 = vmatprep.subr.mxu0 0.0
    %224 = vmatpush1.msra.mxu0 0.0
    %225 = vmatprep.subr.mxu0 0.0
    %226 = vmatpush1.msra.mxu0 0.0
    %227 = vmatprep.subr.mxu0 0.0
    %228 = vmatpush1.msra.mxu0 0.0
    %229 = vmatprep.mubr.f32.mxu0 0.0
    %230 = vmatmul.mubr.f32.gmra.mrb[0].mxu0 %v141
    %v231 = vpop.f32.mrb[0].mxu0
    %v232 = vadd.f32 %v163, %v231
    %v233 = vpop.f32.mrb[0].mxu0
    %234 = vdwg.mxu0
    %235 = vst.msk [vmem:[#allocation4] sm:$0xf] %vm45, %v232
    %v236 = vld [vmem:[%s1] sm:$0xf]
    %v237 = vld [vmem:[%s1 + $0x4] sm:$0xf]
    %v238 = vld [vmem:[%s1 + $0x8] sm:$0xf]
    %v239 = vld [vmem:[%s1 + $0xc] sm:$0xf]
    %v240 = vld [vmem:[%s1 + $0x10] sm:$0xf]
    %v241 = vld [vmem:[%s1 + $0x14] sm:$0xf]
    %v242 = vld [vmem:[%s1 + $0x18] sm:$0xf]
    %v243 = vld [vmem:[%s1 + $0x1c] sm:$0xf]
    %v244 = vld [vmem:[%s1 + $0x20] sm:$0xf]
    %v245 = vld [vmem:[%s1 + $0x24] sm:$0xf]
    %v246 = vld [vmem:[%s1 + $0x28] sm:$0xf]
    %vm247 = vcmask 1043456
    %v248 = vsel %vm247, %v236, 0.0
    %v249 = vsel %vm247, %v237, 0.0
    %v250 = vadd.f32 %v248, %v249
    %v251 = vsel %vm247, %v238, 0.0
    %v252 = vadd.f32 %v250, %v251
    %v253 = vsel %vm247, %v239, 0.0
    %v254 = vadd.f32 %v252, %v253
    %v255 = vsel %vm247, %v240, 0.0
    %v256 = vadd.f32 %v254, %v255
    %v257 = vsel %vm247, %v241, 0.0
    %v258 = vadd.f32 %v256, %v257
    %v259 = vsel %vm247, %v242, 0.0
    %v260 = vadd.f32 %v258, %v259
    %v261 = vsel %vm247, %v243, 0.0
    %v262 = vadd.f32 %v260, %v261
    %v263 = vsel %vm247, %v244, 0.0
    %v264 = vadd.f32 %v262, %v263
    %v265 = vsel %vm247, %v245, 0.0
    %v266 = vadd.f32 %v264, %v265
    %v267 = vsel %vm247, %v246, 0.0
    %v268 = vadd.f32 %v266, %v267
    %v269 = vmul.f32 %v268, 0.09090909
    %v270 = vld [vmem:[%s6] sm:$0xff]
    %v271 = vld [vmem:[%s6 + $0x8] sm:$0xff]
    %v272 = vld [vmem:[%s6 + $0x10] sm:$0xff]
    %v273 = vld [vmem:[%s6 + $0x18] sm:$0xff]
    %v274 = vld [vmem:[%s6 + $0x20] sm:$0xff]
    %v275 = vld [vmem:[%s6 + $0x28] sm:$0xff]
    %v276 = vld [vmem:[%s6 + $0x30] sm:$0xff]
    %v277 = vld [vmem:[%s6 + $0x38] sm:$0xff]
    %v278 = vld [vmem:[%s6 + $0x40] sm:$0xff]
    %v279 = vld [vmem:[%s6 + $0x48] sm:$0xff]
    %v280 = vld [vmem:[%s6 + $0x50] sm:$0xff]
    %v281 = vld [vmem:[%s6 + $0x58] sm:$0xff]
    %v282 = vld [vmem:[%s6 + $0x60] sm:$0xff]
    %v283 = vld [vmem:[%s6 + $0x68] sm:$0xff]
    %v284 = vld [vmem:[%s6 + $0x70] sm:$0xff]
    %v285 = vld [vmem:[%s6 + $0x78] sm:$0xff]
    %v286 = vld [vmem:[%s7] sm:$0x1]
    %v288 = vlaneseq
    %v289 = vshrl.u32 %v288, 7
    %v290 = vsub.s32 0, %v289
    %v291 = vrot.slane %v286, %v290
    %293 = vmatprep.subr.mxu0 0.0
    %294 = vmatpush1.msra.mxu0 %v270
    %295 = vmatprep.subr.mxu0 0.0
    %296 = vmatpush1.msra.mxu0 %v271
    %297 = vmatprep.subr.mxu0 0.0
    %298 = vmatpush1.msra.mxu0 %v272
    %299 = vmatprep.subr.mxu0 0.0
    %300 = vmatpush1.msra.mxu0 %v273
    %301 = vmatprep.subr.mxu0 0.0
    %302 = vmatpush1.msra.mxu0 %v274
    %303 = vmatprep.subr.mxu0 0.0
    %304 = vmatpush1.msra.mxu0 %v275
    %305 = vmatprep.subr.mxu0 0.0
    %306 = vmatpush1.msra.mxu0 %v276
    %307 = vmatprep.subr.mxu0 0.0
    %308 = vmatpush1.msra.mxu0 %v277
    %309 = vmatprep.subr.mxu0 0.0
    %310 = vmatpush1.msra.mxu0 %v278
    %311 = vmatprep.subr.mxu0 0.0
    %312 = vmatpush1.msra.mxu0 %v279
    %313 = vmatprep.subr.mxu0 0.0
    %314 = vmatpush1.msra.mxu0 %v280
    %315 = vmatprep.subr.mxu0 0.0
    %316 = vmatpush1.msra.mxu0 %v281
    %317 = vmatprep.subr.mxu0 0.0
    %318 = vmatpush1.msra.mxu0 %v282
    %319 = vmatprep.subr.mxu0 0.0
    %320 = vmatpush1.msra.mxu0 %v283
    %321 = vmatprep.subr.mxu0 0.0
    %322 = vmatpush1.msra.mxu0 %v284
    %323 = vmatprep.subr.mxu0 0.0
    %324 = vmatpush1.msra.mxu0 %v285
    %325 = vmatprep.subr.mxu0 0.0
    %326 = vmatpush1.msra.mxu0 0.0
    %327 = vmatprep.subr.mxu0 0.0
    %328 = vmatpush1.msra.mxu0 0.0
    %329 = vmatprep.subr.mxu0 0.0
    %330 = vmatpush1.msra.mxu0 0.0
    %331 = vmatprep.subr.mxu0 0.0
    %332 = vmatpush1.msra.mxu0 0.0
    %333 = vmatprep.subr.mxu0 0.0
    %334 = vmatpush1.msra.mxu0 0.0
    %335 = vmatprep.subr.mxu0 0.0
    %336 = vmatpush1.msra.mxu0 0.0
    %337 = vmatprep.subr.mxu0 0.0
    %338 = vmatpush1.msra.mxu0 0.0
    %339 = vmatprep.subr.mxu0 0.0
    %340 = vmatpush1.msra.mxu0 0.0
    %341 = vmatprep.subr.mxu0 0.0
    %342 = vmatpush1.msra.mxu0 0.0
    %343 = vmatprep.subr.mxu0 0.0
    %344 = vmatpush1.msra.mxu0 0.0
    %345 = vmatprep.subr.mxu0 0.0
    %346 = vmatpush1.msra.mxu0 0.0
    %347 = vmatprep.subr.mxu0 0.0
    %348 = vmatpush1.msra.mxu0 0.0
    %349 = vmatprep.subr.mxu0 0.0
    %350 = vmatpush1.msra.mxu0 0.0
    %351 = vmatprep.subr.mxu0 0.0
    %352 = vmatpush1.msra.mxu0 0.0
    %353 = vmatprep.subr.mxu0 0.0
    %354 = vmatpush1.msra.mxu0 0.0
    %355 = vmatprep.subr.mxu0 0.0
    %356 = vmatpush1.msra.mxu0 0.0
    %357 = vmatprep.mubr.f32.mxu0 0.0
    %358 = vmatmul.mubr.f32.gmra.mrb[0].mxu0 %v269
    %v359 = vpop.f32.mrb[0].mxu0
    %v360 = vadd.f32 %v291, %v359
    %v361 = vpop.f32.mrb[0].mxu0
    %362 = vdwg.mxu0
    %v363 = vld [vmem:[%s9] sm:$0xff]
    %364 = vst.msk [vmem:[#allocation2] sm:$0xff] %vm67, %v363
    %365 = vst.msk [vmem:[#allocation2 + $0x8] sm:$0xff] %vm67, %v363
    %366 = vst.msk [vmem:[#allocation2 + $0x10] sm:$0xff] %vm67, %v363
    %367 = vst.msk [vmem:[#allocation2 + $0x18] sm:$0xff] %vm67, %v363
    %v368 = vld [vmem:[%s8] sm:$0xf]
    %v369 = vlaneseq
    %v370 = vshrl.u32 %v369, 7
    %v371 = vsub.s32 0, %v370
    %v372 = vrot.slane %v368, %v371
    %v373 = vadd.f32 %v372, %v360
    %v376 = vunpack.c.l.s4 1966171168
    %v377 = vunpack.c.0.s8 %v376
    %v378 = vlaneseq
    %v379 = vshrl.u32 %v378, 7
    %v380 = vsub.s32 %v377, %v379
    %v381 = vrot.slane %v373, %v380
    %v382 = vcombine.high %v381, %v381
    %v384 = vunpack.c.l.s4 1966171168
    %v385 = vunpack.c.0.s8 %v384
    %v386 = vlaneseq
    %v387 = vshrl.u32 %v386, 7
    %v388 = vsub.s32 %v385, %v387
    %v389 = vrot.slane %v381, %v388
    %v391 = vunpack.c.l.s4 1966171168
    %v392 = vunpack.c.0.s8 %v391
    %v393 = vlaneseq
    %v394 = vshrl.u32 %v393, 7
    %v395 = vsub.s32 %v392, %v394
    %v396 = vrot.slane %v382, %v395
    %v397 = vcombine.high %v389, %v389
    %v398 = vcombine.high %v396, %v396
    %v399 = vlaneseq
    %v400 = vshrl.u32 %v399, 7
    %v401 = vsub.s32 0, %v400
    %v402 = vrot.slane %v389, %v401
    %v403 = vlaneseq
    %v404 = vshrl.u32 %v403, 7
    %v405 = vsub.s32 0, %v404
    %v406 = vrot.slane %v396, %v405
    %v407 = vlaneseq
    %v408 = vshrl.u32 %v407, 7
    %v409 = vsub.s32 0, %v408
    %v410 = vrot.slane %v397, %v409
    %v411 = vlaneseq
    %v412 = vshrl.u32 %v411, 7
    %v413 = vsub.s32 0, %v412
    %v414 = vrot.slane %v398, %v413
    %s419 = scalar_lea.vmem [#allocation2], 32
    %420 = vst.msk [vmem:[%s419] sm:$0xff] %vm67, %v402
    %421 = vst.msk [vmem:[%s419 + $0x8] sm:$0xff] %vm67, %v406
    %422 = vst.msk [vmem:[%s419 + $0x10] sm:$0xff] %vm67, %v410
    %423 = vst.msk [vmem:[%s419 + $0x18] sm:$0xff] %vm67, %v414
    %v424 = vlaneseq
    %v425 = vshrl.u32 %v424, 7
    %v426 = vsub.s32 1, %v425
    %v427 = vrot.slane %v368, %v426
    %v428 = vadd.f32 %v427, %v360
    %v431 = vunpack.c.l.s4 1966171168
    %v432 = vunpack.c.0.s8 %v431
    %v433 = vlaneseq
    %v434 = vshrl.u32 %v433, 7
    %v435 = vsub.s32 %v432, %v434
    %v436 = vrot.slane %v428, %v435
    %v437 = vcombine.high %v436, %v436
    %v439 = vunpack.c.l.s4 1966171168
    %v440 = vunpack.c.0.s8 %v439
    %v441 = vlaneseq
    %v442 = vshrl.u32 %v441, 7
    %v443 = vsub.s32 %v440, %v442
    %v444 = vrot.slane %v436, %v443
    %v446 = vunpack.c.l.s4 1966171168
    %v447 = vunpack.c.0.s8 %v446
    %v448 = vlaneseq
    %v449 = vshrl.u32 %v448, 7
    %v450 = vsub.s32 %v447, %v449
    %v451 = vrot.slane %v437, %v450
    %v452 = vcombine.high %v444, %v444
    %v453 = vcombine.high %v451, %v451
    %v454 = vlaneseq
    %v455 = vshrl.u32 %v454, 7
    %v456 = vsub.s32 0, %v455
    %v457 = vrot.slane %v444, %v456
    %v458 = vlaneseq
    %v459 = vshrl.u32 %v458, 7
    %v460 = vsub.s32 0, %v459
    %v461 = vrot.slane %v451, %v460
    %v462 = vlaneseq
    %v463 = vshrl.u32 %v462, 7
    %v464 = vsub.s32 0, %v463
    %v465 = vrot.slane %v452, %v464
    %v466 = vlaneseq
    %v467 = vshrl.u32 %v466, 7
    %v468 = vsub.s32 0, %v467
    %v469 = vrot.slane %v453, %v468
    %s474 = scalar_lea.vmem [#allocation2], 64
    %475 = vst.msk [vmem:[%s474] sm:$0xff] %vm67, %v457
    %476 = vst.msk [vmem:[%s474 + $0x8] sm:$0xff] %vm67, %v461
    %477 = vst.msk [vmem:[%s474 + $0x10] sm:$0xff] %vm67, %v465
    %478 = vst.msk [vmem:[%s474 + $0x18] sm:$0xff] %vm67, %v469
    %v479 = vlaneseq
    %v480 = vshrl.u32 %v479, 7
    %v481 = vsub.s32 2, %v480
    %v482 = vrot.slane %v368, %v481
    %v483 = vadd.f32 %v482, %v232
    %v486 = vunpack.c.l.s4 1966171168
    %v487 = vunpack.c.0.s8 %v486
    %v488 = vlaneseq
    %v489 = vshrl.u32 %v488, 7
    %v490 = vsub.s32 %v487, %v489
    %v491 = vrot.slane %v483, %v490
    %v492 = vcombine.high %v491, %v491
    %v494 = vunpack.c.l.s4 1966171168
    %v495 = vunpack.c.0.s8 %v494
    %v496 = vlaneseq
    %v497 = vshrl.u32 %v496, 7
    %v498 = vsub.s32 %v495, %v497
    %v499 = vrot.slane %v491, %v498
    %v501 = vunpack.c.l.s4 1966171168
    %v502 = vunpack.c.0.s8 %v501
    %v503 = vlaneseq
    %v504 = vshrl.u32 %v503, 7
    %v505 = vsub.s32 %v502, %v504
    %v506 = vrot.slane %v492, %v505
    %v507 = vcombine.high %v499, %v499
    %v508 = vcombine.high %v506, %v506
    %v509 = vlaneseq
    %v510 = vshrl.u32 %v509, 7
    %v511 = vsub.s32 0, %v510
    %v512 = vrot.slane %v499, %v511
    %v513 = vlaneseq
    %v514 = vshrl.u32 %v513, 7
    %v515 = vsub.s32 0, %v514
    %v516 = vrot.slane %v506, %v515
    %v517 = vlaneseq
    %v518 = vshrl.u32 %v517, 7
    %v519 = vsub.s32 0, %v518
    %v520 = vrot.slane %v507, %v519
    %v521 = vlaneseq
    %v522 = vshrl.u32 %v521, 7
    %v523 = vsub.s32 0, %v522
    %v524 = vrot.slane %v508, %v523
    %s529 = scalar_lea.vmem [#allocation2], 96
    %530 = vst.msk [vmem:[%s529] sm:$0xff] %vm67, %v512
    %531 = vst.msk [vmem:[%s529 + $0x8] sm:$0xff] %vm67, %v516
    %532 = vst.msk [vmem:[%s529 + $0x10] sm:$0xff] %vm67, %v520
    %533 = vst.msk [vmem:[%s529 + $0x18] sm:$0xff] %vm67, %v524
    %v534 = vlaneseq
    %v535 = vshrl.u32 %v534, 7
    %v536 = vsub.s32 3, %v535
    %v537 = vrot.slane %v368, %v536
    %v538 = vadd.f32 %v537, %v232
    %v541 = vunpack.c.l.s4 1966171168
    %v542 = vunpack.c.0.s8 %v541
    %v543 = vlaneseq
    %v544 = vshrl.u32 %v543, 7
    %v545 = vsub.s32 %v542, %v544
    %v546 = vrot.slane %v538, %v545
    %v547 = vcombine.high %v546, %v546
    %v549 = vunpack.c.l.s4 1966171168
    %v550 = vunpack.c.0.s8 %v549
    %v551 = vlaneseq
    %v552 = vshrl.u32 %v551, 7
    %v553 = vsub.s32 %v550, %v552
    %v554 = vrot.slane %v546, %v553
    %v556 = vunpack.c.l.s4 1966171168
    %v557 = vunpack.c.0.s8 %v556
    %v558 = vlaneseq
    %v559 = vshrl.u32 %v558, 7
    %v560 = vsub.s32 %v557, %v559
    %v561 = vrot.slane %v547, %v560
    %v562 = vcombine.high %v554, %v554
    %v563 = vcombine.high %v561, %v561
    %v564 = vlaneseq
    %v565 = vshrl.u32 %v564, 7
    %v566 = vsub.s32 0, %v565
    %v567 = vrot.slane %v554, %v566
    %v568 = vlaneseq
    %v569 = vshrl.u32 %v568, 7
    %v570 = vsub.s32 0, %v569
    %v571 = vrot.slane %v561, %v570
    %v572 = vlaneseq
    %v573 = vshrl.u32 %v572, 7
    %v574 = vsub.s32 0, %v573
    %v575 = vrot.slane %v562, %v574
    %v576 = vlaneseq
    %v577 = vshrl.u32 %v576, 7
    %v578 = vsub.s32 0, %v577
    %v579 = vrot.slane %v563, %v578
    %s584 = scalar_lea.vmem [#allocation2], 128
    %585 = vst.msk [vmem:[%s584] sm:$0xff] %vm67, %v567
    %586 = vst.msk [vmem:[%s584 + $0x8] sm:$0xff] %vm67, %v571
    %587 = vst.msk [vmem:[%s584 + $0x10] sm:$0xff] %vm67, %v575
    %588 = vst.msk [vmem:[%s584 + $0x18] sm:$0xff] %vm67, %v579
    %v589 = vld [vmem:[%s10] sm:$0xff]
    %v590 = vld [vmem:[%s10 + $0x8] sm:$0xff]
    %v591 = vld [vmem:[%s10 + $0x10] sm:$0xff]
    %v592 = vld [vmem:[%s10 + $0x18] sm:$0xff]
    %v593 = vld [vmem:[%s10 + $0x20] sm:$0xff]
    %v594 = vld [vmem:[%s10 + $0x28] sm:$0xff]
    %v595 = vld [vmem:[%s10 + $0x30] sm:$0xff]
    %v596 = vld [vmem:[%s10 + $0x38] sm:$0xff]
    %v597 = vld [vmem:[%s10 + $0x40] sm:$0xff]
    %v598 = vld [vmem:[%s10 + $0x48] sm:$0xff]
    %v599 = vld [vmem:[%s10 + $0x50] sm:$0xff]
    %s600 = scalar_lea.vmem [#allocation2], 160
    %601 = vst.msk [vmem:[%s600] sm:$0xff] %vm67, %v589
    %602 = vst.msk [vmem:[%s600 + $0x8] sm:$0xff] %vm67, %v589
    %603 = vst.msk [vmem:[%s600 + $0x10] sm:$0xff] %vm67, %v589
    %604 = vst.msk [vmem:[%s600 + $0x18] sm:$0xff] %vm67, %v589
    %605 = vst.msk [vmem:[%s600 + $0x20] sm:$0xff] %vm67, %v590
    %606 = vst.msk [vmem:[%s600 + $0x28] sm:$0xff] %vm67, %v590
    %607 = vst.msk [vmem:[%s600 + $0x30] sm:$0xff] %vm67, %v590
    %608 = vst.msk [vmem:[%s600 + $0x38] sm:$0xff] %vm67, %v590
    %609 = vst.msk [vmem:[%s600 + $0x40] sm:$0xff] %vm67, %v591
    %610 = vst.msk [vmem:[%s600 + $0x48] sm:$0xff] %vm67, %v591
    %611 = vst.msk [vmem:[%s600 + $0x50] sm:$0xff] %vm67, %v591
    %612 = vst.msk [vmem:[%s600 + $0x58] sm:$0xff] %vm67, %v591
    %613 = vst.msk [vmem:[%s600 + $0x60] sm:$0xff] %vm67, %v592
    %614 = vst.msk [vmem:[%s600 + $0x68] sm:$0xff] %vm67, %v592
    %615 = vst.msk [vmem:[%s600 + $0x70] sm:$0xff] %vm67, %v592
    %616 = vst.msk [vmem:[%s600 + $0x78] sm:$0xff] %vm67, %v592
    %617 = vst.msk [vmem:[%s600 + $0x80] sm:$0xff] %vm67, %v593
    %618 = vst.msk [vmem:[%s600 + $0x88] sm:$0xff] %vm67, %v593
    %619 = vst.msk [vmem:[%s600 + $0x90] sm:$0xff] %vm67, %v593
    %620 = vst.msk [vmem:[%s600 + $0x98] sm:$0xff] %vm67, %v593
    %621 = vst.msk [vmem:[%s600 + $0xa0] sm:$0xff] %vm67, %v594
    %622 = vst.msk [vmem:[%s600 + $0xa8] sm:$0xff] %vm67, %v594
    %623 = vst.msk [vmem:[%s600 + $0xb0] sm:$0xff] %vm67, %v594
    %624 = vst.msk [vmem:[%s600 + $0xb8] sm:$0xff] %vm67, %v594
    %625 = vst.msk [vmem:[%s600 + $0xc0] sm:$0xff] %vm67, %v595
    %626 = vst.msk [vmem:[%s600 + $0xc8] sm:$0xff] %vm67, %v595
    %627 = vst.msk [vmem:[%s600 + $0xd0] sm:$0xff] %vm67, %v595
    %628 = vst.msk [vmem:[%s600 + $0xd8] sm:$0xff] %vm67, %v595
    %629 = vst.msk [vmem:[%s600 + $0xe0] sm:$0xff] %vm67, %v596
    %630 = vst.msk [vmem:[%s600 + $0xe8] sm:$0xff] %vm67, %v596
    %631 = vst.msk [vmem:[%s600 + $0xf0] sm:$0xff] %vm67, %v596
    %632 = vst.msk [vmem:[%s600 + $0xf8] sm:$0xff] %vm67, %v596
    %633 = vst.msk [vmem:[%s600 + $0x100] sm:$0xff] %vm67, %v597
    %634 = vst.msk [vmem:[%s600 + $0x108] sm:$0xff] %vm67, %v597
    %635 = vst.msk [vmem:[%s600 + $0x110] sm:$0xff] %vm67, %v597
    %636 = vst.msk [vmem:[%s600 + $0x118] sm:$0xff] %vm67, %v597
    %637 = vst.msk [vmem:[%s600 + $0x120] sm:$0xff] %vm67, %v598
    %638 = vst.msk [vmem:[%s600 + $0x128] sm:$0xff] %vm67, %v598
    %639 = vst.msk [vmem:[%s600 + $0x130] sm:$0xff] %vm67, %v598
    %640 = vst.msk [vmem:[%s600 + $0x138] sm:$0xff] %vm67, %v598
    %641 = vst.msk [vmem:[%s600 + $0x140] sm:$0xff] %vm67, %v599
    %642 = vst.msk [vmem:[%s600 + $0x148] sm:$0xff] %vm67, %v599
    %643 = vst.msk [vmem:[%s600 + $0x150] sm:$0xff] %vm67, %v599
    %644 = vst.msk [vmem:[%s600 + $0x158] sm:$0xff] %vm67, %v599
    // Predicated region
    $region46: #{tpu_custom_call.1} parent=1 // pred_check
      _
    $region47: #{tpu_custom_call.1} parent=1 // pred_check_branch
      %646 = sbr.rel (0) target = $region49
    $region48: #{tpu_custom_call.1} parent=1 // pred_region
      %s648 = ssub.s32 8192, 8192
      %649 = vsyncadd [#allocation3], %s648
      %s650 = sshll.u32 [#allocation2], 4
      %s651 = int_to_ptr.vmem [resolvable:$true] %s650
      %656 = dma.vmem_to_hbm [thread:$0]  %s651, 8192, %s11, [#allocation3], 128, 128, 8
    $region49: #{tpu_custom_call.1} parent=1 // pred_fallthru
      _
    // Predicated region
    $region50: #{tpu_custom_call.1} parent=1 // pred_check
      _
    $region51: #{tpu_custom_call.1} parent=1 // pred_check_branch
      %658 = sbr.rel (0) target = $region53
    $region52: #{tpu_custom_call.1} parent=1 // pred_region
      %s660 = ssub.s32 64, 64
      %661 = vsyncadd [#allocation5], %s660
      %s663 = sshll.u32 [#allocation4], 4
      %s664 = int_to_ptr.vmem [resolvable:$true] %s663
      %666 = dma.vmem_to_hbm [thread:$0]  %s664, 64, %s12, [#allocation5]
    $region53: #{tpu_custom_call.1} parent=1 // pred_fallthru
      _
    // Predicated region
    $region54: #{tpu_custom_call.1} parent=1 // pred_check
      _
    $region55: #{tpu_custom_call.1} parent=1 // pred_check_branch
      %668 = sbr.rel (0) target = $region57
    $region56: #{tpu_custom_call.1} parent=1 // pred_region
      %s670 = ssub.s32 64, 64
      %671 = vsyncadd [#allocation5], %s670
      %s673 = sshll.u32 [#allocation6], 4
      %s674 = int_to_ptr.vmem [resolvable:$true] %s673
      %676 = dma.vmem_to_hbm [thread:$0]  %s674, 64, %s13, [#allocation5]
    $region57: #{tpu_custom_call.1} parent=1 // pred_fallthru
      _
    // Predicated region
    $region58: #{tpu_custom_call.1} parent=1 // pred_check
      _
    $region59: #{tpu_custom_call.1} parent=1 // pred_check_branch
      %678 = sbr.rel (0) target = $region61
    $region60: #{tpu_custom_call.1} parent=1 // pred_region
      %679 = dma.done [#allocation3], 8192
    $region61: #{tpu_custom_call.1} parent=1 // pred_fallthru
      _
    // Predicated region
    $region62: #{tpu_custom_call.1} parent=1 // pred_check
      _
    $region63: #{tpu_custom_call.1} parent=1 // pred_check_branch
      %681 = sbr.rel (0) target = $region65
    $region64: #{tpu_custom_call.1} parent=1 // pred_region
      %682 = dma.done [#allocation5], 64
    $region65: #{tpu_custom_call.1} parent=1 // pred_fallthru
      _
    // Predicated region
    $region66: #{tpu_custom_call.1} parent=1 // pred_check
      _
    $region67: #{tpu_custom_call.1} parent=1 // pred_check_branch
      %684 = sbr.rel (0) target = $region69
    $region68: #{tpu_custom_call.1} parent=1 // pred_region
      %685 = dma.done [#allocation5], 64
    $region69: #{tpu_custom_call.1} parent=1 // pred_fallthru
      _
    %686 = vsyncpa [#allocation3], 1
    %687 = vsyncpa [#allocation5], 1

</llo_original>
